<compile_context>
chip_gen: v6e
topology: v6e:2x2x1
jax: 0.10.0
libtpu: 0.0.40
codegen_flags: <defaults>
</compile_context>

<pallas_src>
import functools

import jax
import jax.numpy as jnp
from jax import lax
from jax.experimental import pallas as pl
from jax.experimental.pallas import tpu as pltpu

LANES = 128
SUBLANES = 8  # f32 sublane granularity (accumulator layout / grouped adds)


def _mse_kernel(x_ref, t_ref, o_ref, acc_ref, *,
                tile_rows, valid_rows, steps, num_blocks, scale,
                needs_mask, needs_skip):
    c = pl.program_id(0)          # core-split axis ("parallel")
    i = pl.program_id(1)          # reduction axis ("arbitrary")
    blk = c * steps + i           # global block index

    @pl.when(i == 0)
    def _():
        acc_ref[...] = jnp.zeros_like(acc_ref)

    def accumulate(masked):
        # Hot path: load native dtype, upcast, subtract, square, grouped add.
        x = x_ref[...].astype(jnp.float32)
        t = t_ref[...].astype(jnp.float32)
        d = x - t
        if masked:
            # Only the globally last block can be partial; zero the OOB rows
            # (their VMEM contents are unspecified after the clamped DMA).
            row = blk * tile_rows + lax.broadcasted_iota(jnp.int32, d.shape, 0)
            d = jnp.where(row < valid_rows, d, 0.0)
        d2 = d * d
        # Sublane-grouped accumulation: pure cross-vreg VPU adds, no per-step
        # cross-lane (XLU) reduce.
        acc_ref[...] += d2.reshape(
            tile_rows // SUBLANES, SUBLANES, LANES).sum(axis=0)

    if needs_mask:
        # Dense blocks (everything before the last real block).
        @pl.when(blk < num_blocks - 1)
        def _():
            accumulate(False)

        # Exactly the last real block pays the mask; overflow blocks
        # (blk >= num_blocks, possible with the odd-count core split) are
        # skipped entirely.
        @pl.when(blk == num_blocks - 1)
        def _():
            accumulate(True)
    elif needs_skip:
        @pl.when(blk < num_blocks)
        def _():
            accumulate(False)
    else:
        accumulate(False)

    @pl.when(i == steps - 1)
    def _():
        # Single cross-lane reduce + scalar scale, once per core partial.
        o_ref[0, 0] = jnp.sum(acc_ref[...]) * jnp.float32(scale)


def _default_tile_rows():
    """Per-generation block size (rows of 128 f32 lanes).

    8192 rows = 4 MiB per input block -> 16 MiB with 2 inputs x 2 buffers,
    inside the 32 MiB scoped-VMEM default of v6e / v7x.  Everything else
    (incl. v5e's 16 MiB scoped default) gets 4096 rows (8 MiB total).
    """
    try:
        kind = jax.devices()[0].device_kind.lower()
    except Exception:
        return 4096
    if ("v6" in kind) or ("v7" in kind) or ("7x" in kind):
        return 8192
    return 4096


def mse_pn_one(inp, tgt, *, tile_rows=None):
    """Pallas implementation of MSEPNOne.forward(input, target)."""
    assert inp.shape == tgt.shape
    n = int(inp.size)
    assert n > 0

    xf = inp.reshape(-1)
    tf = tgt.reshape(-1)

    itemsize = jnp.dtype(inp.dtype).itemsize
    sub = {4: 8, 2: 16, 1: 32}.get(itemsize, 8)   # native sublane granularity

    # Minimal padding: only when N is not lane-aligned or smaller than one
    # native tile.  Padded positions are zero in BOTH operands -> diff == 0,
    # so they never need masking.  Row raggedness is handled in-kernel.
    rows_raw = -(-n // LANES)
    if (n % LANES != 0) or (rows_raw < sub):
        padded_len = max(rows_raw, sub) * LANES
        pad = padded_len - n
        xf = jnp.pad(xf, (0, pad))
        tf = jnp.pad(tf, (0, pad))

    rows = int(xf.size) // LANES
    x2 = xf.reshape(rows, LANES)
    t2 = tf.reshape(rows, LANES)

    if tile_rows is None:
        tile_rows = _default_tile_rows()
    # Tile: as large as possible, never larger than the data, rounded to the
    # dtype's native sublane multiple (always a multiple of 8 for the f32
    # accumulator grouping).
    tr = min(tile_rows, rows)
    tr = max(sub, (tr // sub) * sub)

    num_blocks = -(-rows // tr)
    needs_mask = (rows % tr) != 0

    # Unconditional 2-way split of the reduction over a leading "parallel"
    # axis whenever there are >= 2 blocks (lets v7x use both TensorCores;
    # runs serially and near-free on single-core v5e / v6e).  Odd block
    # counts: clamp the index_map and skip the overflow block in-kernel.
    split = 2 if num_blocks >= 2 else 1
    steps = -(-num_blocks // split)
    needs_skip = (split * steps) != num_blocks

    scale = 0.25 / n

    if needs_skip:
        def in_map(c, i):
            return (jnp.minimum(c * steps + i, num_blocks - 1), 0)
    else:
        def in_map(c, i):
            return (c * steps + i, 0)

    kernel = functools.partial(
        _mse_kernel,
        tile_rows=tr,
        valid_rows=rows,
        steps=steps,
        num_blocks=num_blocks,
        scale=scale,
        needs_mask=needs_mask,
        needs_skip=needs_skip,
    )

    out = pl.pallas_call(
        kernel,
        out_shape=jax.ShapeDtypeStruct((split, 1), jnp.float32),
        grid_spec=pltpu.PrefetchScalarGridSpec(
            num_scalar_prefetch=0,
            grid=(split, steps),
            in_specs=[
                pl.BlockSpec((tr, LANES), in_map),
                pl.BlockSpec((tr, LANES), in_map),
            ],
            out_specs=pl.BlockSpec(
                (1, 1), lambda c, i: (c, 0),
                memory_space=pltpu.MemorySpace.SMEM,
            ),
            scratch_shapes=[pltpu.VMEM((SUBLANES, LANES), jnp.float32)],
        ),
        compiler_params=pltpu.CompilerParams(
            dimension_semantics=("parallel", "arbitrary"),
        ),
    )(x2, t2)

    # Sum the (at most two) per-core partials.
    return jnp.sum(out)


if __name__ == "__main__":
    # MSEPNOne has no learnable parameters (only nn.MSELoss).
    key = jax.random.PRNGKey(0)
    k1, k2 = jax.random.split(key)
    # Small NCHW-like shapes consistent with typical usage.
    inp = jax.random.normal(k1, (2, 4, 16, 16), dtype=jnp.float32)
    tgt = jax.random.normal(k2, (2, 4, 16, 16), dtype=jnp.float32)

    loss = jax.block_until_ready(mse_pn_one(inp, tgt))

    # Reference check in plain JAX (same math as the PyTorch module).
    ref = jnp.mean(((inp + 1.0) / 2.0 - (tgt + 1.0) / 2.0) ** 2)
    assert jnp.allclose(loss, ref, rtol=1e-5, atol=1e-6), (loss, ref)

    print("KERNEL_OK")
</pallas_src>

<mosaic_0001>
module attributes {stable_mosaic.version = 11 : i64} {
  func.func @_mse_kernel(%arg0: i32, %arg1: i32, %arg2: memref<16x128xf32, #tpu.memory_space<vmem>>, %arg3: memref<16x128xf32, #tpu.memory_space<vmem>>, %arg4: memref<1x1xf32, #tpu.memory_space<smem>>, %arg5: memref<8x128xf32, #tpu.memory_space<vmem>>) attributes {dimension_semantics = [#tpu.dimension_semantics<parallel>, #tpu.dimension_semantics<arbitrary>], iteration_bounds = array<i64: 1, 1>, scalar_prefetch = 0 : i64, scratch_operands = 1 : i64, tpu.core_type = #tpu.core_type<tc>, window_params = [{transform_indices = @transform_0, window_bounds = array<i64: 16, 128>}, {transform_indices = @transform_1, window_bounds = array<i64: 16, 128>}, {transform_indices = @transform_2, window_bounds = array<i64: 1, 1>}]} {
    %c0_i32 = arith.constant 0 : i32
    %0 = arith.cmpi eq, %arg1, %c0_i32 : i32
    %1 = arith.extui %0 : i1 to i32
    %c0_i32_0 = arith.constant 0 : i32
    %2 = arith.cmpi ne, %1, %c0_i32_0 : i32
    scf.if %2 {
      %cst_10 = arith.constant 0.000000e+00 : f32
      %15 = vector.broadcast %cst_10 : f32 to vector<8x128xf32>
      %c0_11 = arith.constant 0 : index
      %c0_12 = arith.constant 0 : index
      %16 = vector.load %arg5[%c0_11, %c0_12] : memref<8x128xf32, #tpu.memory_space<vmem>>, vector<8x128xf32>
      tpu.vector_store %arg5[%c0_11, %c0_12], %15 {strides = array<i32>} : memref<8x128xf32, #tpu.memory_space<vmem>>, vector<8x128xf32>,
    } else {
    }
    %c0 = arith.constant 0 : index
    %c0_1 = arith.constant 0 : index
    %3 = vector.load %arg2[%c0, %c0_1] : memref<16x128xf32, #tpu.memory_space<vmem>>, vector<16x128xf32>
    %c0_2 = arith.constant 0 : index
    %c0_3 = arith.constant 0 : index
    %4 = vector.load %arg3[%c0_2, %c0_3] : memref<16x128xf32, #tpu.memory_space<vmem>>, vector<16x128xf32>
    %5 = arith.subf %3, %4 : vector<16x128xf32>
    %6 = arith.mulf %5, %5 : vector<16x128xf32>
    %c0_4 = arith.constant 0 : index
    %c0_5 = arith.constant 0 : index
    %7 = vector.load %arg5[%c0_4, %c0_5] : memref<8x128xf32, #tpu.memory_space<vmem>>, vector<8x128xf32>
    %8 = vector.shape_cast %6 : vector<16x128xf32> to vector<2x8x128xf32>
    %cst = arith.constant dense<0.000000e+00> : vector<8x128xf32>
    %9 = vector.multi_reduction <add>, %8, %cst [0] : vector<2x8x128xf32> to vector<8x128xf32>
    %10 = arith.addf %7, %9 : vector<8x128xf32>
    %c0_6 = arith.constant 0 : index
    %c0_7 = arith.constant 0 : index
    %11 = vector.load %arg5[%c0_6, %c0_7] : memref<8x128xf32, #tpu.memory_space<vmem>>, vector<8x128xf32>
    tpu.vector_store %arg5[%c0_6, %c0_7], %10 {strides = array<i32>} : memref<8x128xf32, #tpu.memory_space<vmem>>, vector<8x128xf32>,
    %c0_i32_8 = arith.constant 0 : i32
    %12 = arith.cmpi eq, %arg1, %c0_i32_8 : i32
    %13 = arith.extui %12 : i1 to i32
    %c0_i32_9 = arith.constant 0 : i32
    %14 = arith.cmpi ne, %13, %c0_i32_9 : i32
    scf.if %14 {
      %c0_10 = arith.constant 0 : index
      %c0_11 = arith.constant 0 : index
      %15 = vector.load %arg5[%c0_10, %c0_11] : memref<8x128xf32, #tpu.memory_space<vmem>>, vector<8x128xf32>
      %16 = vector.shape_cast %15 : vector<8x128xf32> to vector<1x8x128xf32>
      %cst_12 = arith.constant dense<0.000000e+00> : vector<1xf32>
      %17 = vector.multi_reduction <add>, %16, %cst_12 [1, 2] : vector<1x8x128xf32> to vector<1xf32>
      %18 = vector.shape_cast %17 : vector<1xf32> to vector<1x1x1xf32>
      %19 = vector.extract %18[0, 0, 0] : f32 from vector<1x1x1xf32>
      %cst_13 = arith.constant 1.22070313E-4 : f32
      %20 = arith.mulf %19, %cst_13 : f32
      %c0_14 = arith.constant 0 : index
      %c0_15 = arith.constant 0 : index
      %21 = memref.load %arg4[%c0_14, %c0_15] : memref<1x1xf32, #tpu.memory_space<smem>>
      memref.store %20, %arg4[%c0_14, %c0_15] : memref<1x1xf32, #tpu.memory_space<smem>>
    } else {
    }
    return
  }
  func.func @transform_0(%arg0: i32, %arg1: i32) -> (i32, i32) {
    %c1_i32 = arith.constant 1 : i32
    %0 = arith.muli %arg0, %c1_i32 : i32
    %1 = arith.addi %0, %arg1 : i32
    %c0_i32 = arith.constant 0 : i32
    %c0_i32_0 = arith.constant 0 : i32
    return %1, %c0_i32 : i32, i32
  }
  func.func @transform_1(%arg0: i32, %arg1: i32) -> (i32, i32) {
    %c1_i32 = arith.constant 1 : i32
    %0 = arith.muli %arg0, %c1_i32 : i32
    %1 = arith.addi %0, %arg1 : i32
    %c0_i32 = arith.constant 0 : i32
    %c0_i32_0 = arith.constant 0 : i32
    return %1, %c0_i32 : i32, i32
  }
  func.func @transform_2(%arg0: i32, %arg1: i32) -> (i32, i32) {
    %c0_i32 = arith.constant 0 : i32
    %c0_i32_0 = arith.constant 0 : i32
    return %arg0, %c0_i32 : i32, i32
  }
}

</mosaic_0001>

<llo_original>
// kernel: tpu_custom_call.1
$region0: #{tpu_custom_call.1}
  #allocation0 [shape = 'u32[]', space=smem, size = 0x4, offset = 0x4, fixed_abs, tag = 'smem constant byte address 0x4 - core index']
  #allocation1 [shape = 'u32[144,128]{1,0:T(1,128)}', space=vmem, size = 0x12000, scoped, tag = 'internal scratch']
  #allocation2 [shape = 'f32[8,128]{1,0:T(8,128)}', space=vmem, size = 0x1000, scoped, tag = 'scratch operand']
  %s0 = inlined_call_operand.hbm [shape: f32[16,128], index: 0, kind: input, shape index: {}]
  %s1 = inlined_call_operand.hbm [shape: f32[16,128], index: 1, kind: input, shape index: {}]
  %s2 = inlined_call_operand.hbm [shape: f32[1,1], index: 2, kind: output, shape index: {}]
  %s3 = sld [smem:[#allocation0]]
  $region34: #{tpu_custom_call.1} parent=0
    _
  %s5 = ssub.s32 1, %s3
  %s6 = scalar_select 0, %s5, %s3
  $region1: #{tpu_custom_call.1} parent=0
    #allocation3 [shape = 'u8[8192]{0}', space=vmem, size = 0x2000, scoped, tag = 'input window, operand 0, single buffered']
    #allocation4 [shape = 's32[1]{0}', space=sflag, size = 0x4, scoped, tag = 'scoped memory for tpu_custom_call.1']
    #allocation5 [shape = 's32[1]{0}', space=sflag, size = 0x4, scoped, tag = 'scoped memory for tpu_custom_call.1']
    #allocation6 [shape = 'u8[8192]{0}', space=vmem, size = 0x2000, scoped, tag = 'input window, operand 1, single buffered']
    #allocation7 [shape = 's32[1]{0}', space=sflag, size = 0x4, scoped, tag = 'scoped memory for tpu_custom_call.1']
    #allocation8 [shape = 'u8[512]{0}', space=smem, size = 0x200, scoped, tag = 'output window, operand 0, single buffered']
    %7 = vsyncpa [#allocation4], 0
    %8 = vsyncpa [#allocation7], 0
    %9 = vsyncpa [#allocation5], 0
    // Predicated region
    $region2: #{tpu_custom_call.1} parent=1 // pred_check
      _
    $region3: #{tpu_custom_call.1} parent=1 // pred_check_branch
      %11 = sbr.rel (0) target = $region5
    $region4: #{tpu_custom_call.1} parent=1 // pred_region
      %s12 = sadd.s32 0, 0
      %s13 = smul.u32 2, %s12
      %s15 = ssub.s32 256, 256
      %16 = vsyncadd [#allocation4], %s15
      %s17 = smul.addr %s13, 128
      %s18 = scalar_lea.hbm %s0, %s17
      %s19 = sshll.u32 [#allocation3], 4
      %s20 = int_to_ptr.vmem [resolvable:$true] %s19
      %25 = dma.hbm_to_vmem [thread:$0]  %s18, 256, %s20, [#allocation4], 128, 128, 8
    $region5: #{tpu_custom_call.1} parent=1 // pred_fallthru
      _
    // Predicated region
    $region6: #{tpu_custom_call.1} parent=1 // pred_check
      _
    $region7: #{tpu_custom_call.1} parent=1 // pred_check_branch
      %27 = sbr.rel (0) target = $region9
    $region8: #{tpu_custom_call.1} parent=1 // pred_region
      %s28 = sadd.s32 0, 0
      %s29 = smul.u32 2, %s28
      %s31 = ssub.s32 256, 256
      %32 = vsyncadd [#allocation7], %s31
      %s33 = smul.addr %s29, 128
      %s34 = scalar_lea.hbm %s1, %s33
      %s35 = sshll.u32 [#allocation6], 4
      %s36 = int_to_ptr.vmem [resolvable:$true] %s35
      %41 = dma.hbm_to_vmem [thread:$0]  %s34, 256, %s36, [#allocation7], 128, 128, 8
    $region9: #{tpu_custom_call.1} parent=1 // pred_fallthru
      _
    // Predicated region
    $region10: #{tpu_custom_call.1} parent=1 // pred_check
      _
    $region11: #{tpu_custom_call.1} parent=1 // pred_check_branch
      %43 = sbr.rel (0) target = $region13
    $region12: #{tpu_custom_call.1} parent=1 // pred_region
      %44 = dma.done [#allocation4], 256
    $region13: #{tpu_custom_call.1} parent=1 // pred_fallthru
      _
    // Predicated region
    $region14: #{tpu_custom_call.1} parent=1 // pred_check
      _
    $region15: #{tpu_custom_call.1} parent=1 // pred_check_branch
      %46 = sbr.rel (0) target = $region17
    $region16: #{tpu_custom_call.1} parent=1 // pred_region
      %47 = dma.done [#allocation7], 256
    $region17: #{tpu_custom_call.1} parent=1 // pred_fallthru
      _
    %s48 = sadd.s32 0, 0
    %s49 = smul.u32 2, %s48
    %s50 = sadd.s32 0, 0
    %s51 = smul.u32 2, %s50
    %p52 = scmp.eq.s32.totalorder 0, 0
    // Predicated region
    $region18: #{tpu_custom_call.1} parent=1 // pred_check
      %p53 = pneg %p52
    $region19: #{tpu_custom_call.1} parent=1 // pred_check_branch
      %55 = sbr.rel (%p53) target = $region21
    $region20: #{tpu_custom_call.1} parent=1 // pred_region
      %56 = vst [vmem:[#allocation2] sm:$0xff] 0.0
    $region21: #{tpu_custom_call.1} parent=1 // pred_fallthru
      _
    %v57 = vld [vmem:[#allocation3] sm:$0xff]
    %v58 = vld [vmem:[#allocation3 + $0x8] sm:$0xff]
    %v59 = vld [vmem:[#allocation6] sm:$0xff]
    %v60 = vld [vmem:[#allocation6 + $0x8] sm:$0xff]
    %v61 = vsub.f32 %v57, %v59
    %v62 = vsub.f32 %v58, %v60
    %v63 = vmul.f32 %v61, %v61
    %v64 = vmul.f32 %v62, %v62
    %v65 = vld [vmem:[#allocation2] sm:$0xff]
    %v66 = vadd.f32 %v63, %v64
    %v67 = vadd.f32 %v65, %v66
    %68 = vst [vmem:[#allocation2] sm:$0xff] %v67
    // Predicated region
    $region22: #{tpu_custom_call.1} parent=1 // pred_check
      %p69 = pneg %p52
    $region23: #{tpu_custom_call.1} parent=1 // pred_check_branch
      %71 = sbr.rel (%p69) target = $region25
    $region24: #{tpu_custom_call.1} parent=1 // pred_region
      %v72 = vld [vmem:[#allocation2] sm:$0xff]
      %73 = vadd.xlane.f32.xlu0 %v72
      %v74 = vpop.xlane.xlu0 %73
      %v75 = vrot.slane %v74, 4
      %v76 = vadd.f32 %v74, %v75
      %v77 = vrot.slane %v76, 2
      %v78 = vadd.f32 %v76, %v77
      %v79 = vrot.slane %v78, 1
      %v80 = vadd.f32 %v78, %v79
      %s81 = vtos %v80
      %s82 = smul.f32 %s81, 0.00012207031
      %s83 = scalar_lea.smem [#allocation8], 0
      %84 = sst [smem:[%s83]] %s82
    $region25: #{tpu_custom_call.1} parent=1 // pred_fallthru
      _
    // Predicated region
    $region26: #{tpu_custom_call.1} parent=1 // pred_check
      _
    $region27: #{tpu_custom_call.1} parent=1 // pred_check_branch
      %86 = sbr.rel (0) target = $region29
    $region28: #{tpu_custom_call.1} parent=1 // pred_region
      %s88 = ssub.s32 16, 16
      %89 = vsyncadd [#allocation5], %s88
      %92 = dma.smem_to_hbm [#allocation8], 16, %s2, [#allocation5]
    $region29: #{tpu_custom_call.1} parent=1 // pred_fallthru
      _
    // Predicated region
    $region30: #{tpu_custom_call.1} parent=1 // pred_check
      _
    $region31: #{tpu_custom_call.1} parent=1 // pred_check_branch
      %94 = sbr.rel (0) target = $region33
    $region32: #{tpu_custom_call.1} parent=1 // pred_region
      %95 = dma.done [#allocation5], 16
    $region33: #{tpu_custom_call.1} parent=1 // pred_fallthru
      _
    %96 = sfence
    %97 = vsyncpa [#allocation4], 1
    %98 = vsyncpa [#allocation7], 1
    %99 = vsyncpa [#allocation5], 1

</llo_original>
